<compile_context>
chip_gen: v6e
topology: v6e:2x2x1
jax: 0.10.0
libtpu: 0.0.40
codegen_flags: <defaults>
</compile_context>

<pallas_src>
import jax
import jax.numpy as jnp
from jax.experimental import pallas as pl
from jax.experimental.pallas import tpu as pltpu

_LANE = 128
_VMEM_BUDGET = 40 * 1024 * 1024   # design budget: fits v7x's 64 MiB physical VMEM
_VMEM_LIMIT = 64 * 1024 * 1024    # scoped limit handed to the compiler


# ---------------------------------------------------------------------------
# Small helpers
# ---------------------------------------------------------------------------
def _round_up(n, m):
    return ((n + m - 1) // m) * m


def _pad_2d(a, rows, cols):
    pr, pc = rows - a.shape[0], cols - a.shape[1]
    if pr == 0 and pc == 0:
        return a
    return jnp.pad(a, ((0, pr), (0, pc)))


def _sublane(dtype):
    # Sublane packing of the compute dtype: 8 for f32, 16 for bf16, 32 for int8.
    return {4: 8, 2: 16, 1: 32}[jnp.dtype(dtype).itemsize]


def _vmem_estimate(tb, d, h_pad, e_pad, n_branches, in_itemsize, out_itemsize):
    # Double-buffered pipelined input/output blocks, weights counted at 2
    # buffers (conservative), plus f32 intermediates per branch.
    inputs = n_branches * 2 * tb * d * in_itemsize
    outputs = n_branches * 2 * tb * e_pad * out_itemsize
    weights = 2 * (d * h_pad + h_pad + h_pad * e_pad + e_pad) * 4
    inter = 2 * tb * (h_pad + e_pad) * 4
    return inputs + outputs + weights + inter


def _pick_batch_tile(b, d, h_pad, e_pad, n_branches, in_dtype, out_dtype):
    sub = _sublane(in_dtype)
    in_sz = jnp.dtype(in_dtype).itemsize
    out_sz = jnp.dtype(out_dtype).itemsize

    def fits(tb):
        return _vmem_estimate(tb, d, h_pad, e_pad, n_branches, in_sz, out_sz) <= _VMEM_BUDGET

    tb = b  # fallback: one full (untiled) block
    for cand in (1024, 512, 256, 128, 64, 32, 16, 8):
        if cand <= b and b % cand == 0 and cand % sub == 0 and fits(cand):
            tb = cand
            break
    # v7x has 2 TensorCores: make sure the "parallel" grid axis has >= 2 steps
    # when the batch can be split into two sublane-aligned tiles.
    if tb == b and b % 2 == 0 and (b // 2) >= sub and (b // 2) % sub == 0:
        tb = b // 2
    return tb


def _weight_specs(d, h_pad, e_pad):
    # Shared weights: full blocks with constant index_map -> DMA'd once and
    # VMEM-resident across all batch tiles.
    # TODO(synk): on v7x, pipeline_mode=pl.Buffered(1) on these constant-index
    # specs would drop the second (unused) weight buffer; omitted for portability.
    return [
        pl.BlockSpec((d, h_pad), lambda i: (0, 0)),      # W1  (D, H_pad)
        pl.BlockSpec((1, h_pad), lambda i: (0, 0)),      # b1  (1, H_pad) f32
        pl.BlockSpec((h_pad, e_pad), lambda i: (0, 0)),  # W2  (H_pad, E_pad)
        pl.BlockSpec((1, e_pad), lambda i: (0, 0)),      # b2  (1, E_pad) f32
    ]


def _prepare_weights(params, compute_dtype):
    w1, b1, w2, b2 = params
    d, h = w1.shape
    e = w2.shape[1]
    h_pad = _round_up(h, _LANE)
    e_pad = _round_up(e, _LANE)
    w1p = _pad_2d(w1, d, h_pad)
    b1p = _pad_2d(b1.reshape(1, h), 1, h_pad).astype(jnp.float32)
    w2p = _pad_2d(w2, h_pad, e_pad)
    b2p = _pad_2d(b2.reshape(1, e), 1, e_pad).astype(jnp.float32)
    if compute_dtype is not None:
        w1p = w1p.astype(compute_dtype)
        w2p = w2p.astype(compute_dtype)
    return (w1p, b1p, w2p, b2p), d, h_pad, e, e_pad


# ---------------------------------------------------------------------------
# Kernels
# ---------------------------------------------------------------------------
def _emb_block(x, w1, b1, w2, b2):
    # MXU matmuls accumulate in f32; bias/ReLU epilogue stays f32 on the VPU.
    h = jnp.dot(x, w1, preferred_element_type=jnp.float32) + b1
    h = jnp.maximum(h, 0.0)
    return jnp.dot(h.astype(w2.dtype), w2, preferred_element_type=jnp.float32) + b2


def _triplet_kernel(x1_ref, x2_ref, x3_ref, w1_ref, b1_ref, w2_ref, b2_ref,
                    o1_ref, o2_ref, o3_ref):
    # Shared weights stay VMEM-resident; each branch is an independent dot
    # chain (no in-VMEM concatenate / slice seams). Outputs are lane-dense
    # (TB, E_pad) tiles -> unmasked stores.
    w1, b1, w2, b2 = w1_ref[...], b1_ref[...], w2_ref[...], b2_ref[...]
    o1_ref[...] = _emb_block(x1_ref[...], w1, b1, w2, b2).astype(o1_ref.dtype)
    o2_ref[...] = _emb_block(x2_ref[...], w1, b1, w2, b2).astype(o2_ref.dtype)
    o3_ref[...] = _emb_block(x3_ref[...], w1, b1, w2, b2).astype(o3_ref.dtype)


def _embedding_kernel(x_ref, w1_ref, b1_ref, w2_ref, b2_ref, o_ref):
    # Single-branch path for get_embedding (no redundant work).
    o_ref[...] = _emb_block(x_ref[...], w1_ref[...], b1_ref[...],
                            w2_ref[...], b2_ref[...]).astype(o_ref.dtype)


# ---------------------------------------------------------------------------
# Wrappers
# ---------------------------------------------------------------------------
def triplet_net_forward(x1, x2, x3, params, *, compute_dtype=None,
                        out_dtype=jnp.float32):
    """TripletNet.forward: (emb(x1), emb(x2), emb(x3)) with shared weights."""
    (w1p, b1p, w2p, b2p), d, h_pad, e, e_pad = _prepare_weights(params, compute_dtype)
    B = x1.shape[0]

    if compute_dtype is not None:
        x1, x2, x3 = (v.astype(compute_dtype) for v in (x1, x2, x3))

    tb = _pick_batch_tile(B, d, h_pad, e_pad, 3, x1.dtype, out_dtype)
    grid = (B // tb,)

    x_spec = pl.BlockSpec((tb, d), lambda i: (i, 0))
    o_spec = pl.BlockSpec((tb, e_pad), lambda i: (i, 0))

    w_bytes = (w1p.size * w1p.dtype.itemsize + w2p.size * w2p.dtype.itemsize
               + b1p.size * 4 + b2p.size * 4)
    cost = pl.CostEstimate(
        flops=2 * 3 * B * (d * h_pad + h_pad * e_pad),
        transcendentals=0,
        bytes_accessed=int(3 * B * d * x1.dtype.itemsize + w_bytes
                           + 3 * B * e_pad * jnp.dtype(out_dtype).itemsize),
    )

    o1, o2, o3 = pl.pallas_call(
        _triplet_kernel,
        out_shape=tuple(jax.ShapeDtypeStruct((B, e_pad), out_dtype) for _ in range(3)),
        grid_spec=pltpu.PrefetchScalarGridSpec(
            num_scalar_prefetch=0,
            grid=grid,
            in_specs=[x_spec, x_spec, x_spec] + _weight_specs(d, h_pad, e_pad),
            out_specs=[o_spec, o_spec, o_spec],
        ),
        compiler_params=pltpu.CompilerParams(
            dimension_semantics=("parallel",),   # batch tiles are independent
            vmem_limit_bytes=_VMEM_LIMIT,
        ),
        cost_estimate=cost,
    )(x1, x2, x3, w1p, b1p, w2p, b2p)

    # Slice the lane-padded outputs back to the true embedding width.
    if e_pad != e:
        o1, o2, o3 = o1[:, :e], o2[:, :e], o3[:, :e]
    return o1, o2, o3


def get_embedding(x, params, *, compute_dtype=None, out_dtype=jnp.float32):
    """TripletNet.get_embedding: single-branch embedding (its own kernel)."""
    (w1p, b1p, w2p, b2p), d, h_pad, e, e_pad = _prepare_weights(params, compute_dtype)
    B = x.shape[0]

    if compute_dtype is not None:
        x = x.astype(compute_dtype)

    tb = _pick_batch_tile(B, d, h_pad, e_pad, 1, x.dtype, out_dtype)
    grid = (B // tb,)

    w_bytes = (w1p.size * w1p.dtype.itemsize + w2p.size * w2p.dtype.itemsize
               + b1p.size * 4 + b2p.size * 4)
    cost = pl.CostEstimate(
        flops=2 * B * (d * h_pad + h_pad * e_pad),
        transcendentals=0,
        bytes_accessed=int(B * d * x.dtype.itemsize + w_bytes
                           + B * e_pad * jnp.dtype(out_dtype).itemsize),
    )

    out = pl.pallas_call(
        _embedding_kernel,
        out_shape=jax.ShapeDtypeStruct((B, e_pad), out_dtype),
        grid_spec=pltpu.PrefetchScalarGridSpec(
            num_scalar_prefetch=0,
            grid=grid,
            in_specs=[pl.BlockSpec((tb, d), lambda i: (i, 0))]
                     + _weight_specs(d, h_pad, e_pad),
            out_specs=pl.BlockSpec((tb, e_pad), lambda i: (i, 0)),
        ),
        compiler_params=pltpu.CompilerParams(
            dimension_semantics=("parallel",),
            vmem_limit_bytes=_VMEM_LIMIT,
        ),
        cost_estimate=cost,
    )(x, w1p, b1p, w2p, b2p)

    return out[:, :e] if e_pad != e else out


def init_params(key, d_in, hidden, d_emb):
    k1, k2 = jax.random.split(key)
    w1 = jax.random.normal(k1, (d_in, hidden), jnp.float32) * 0.05
    b1 = jnp.zeros((1, hidden), jnp.float32)
    w2 = jax.random.normal(k2, (hidden, d_emb), jnp.float32) * 0.05
    b2 = jnp.zeros((1, d_emb), jnp.float32)
    return (w1, b1, w2, b2)


if __name__ == "__main__":
    B, D, H, E = 8, 32, 64, 16

    key = jax.random.PRNGKey(0)
    kp, k1, k2, k3 = jax.random.split(key, 4)

    params = init_params(kp, D, H, E)
    x1 = jax.random.normal(k1, (B, D), jnp.float32)
    x2 = jax.random.normal(k2, (B, D), jnp.float32)
    x3 = jax.random.normal(k3, (B, D), jnp.float32)

    out1, out2, out3 = triplet_net_forward(x1, x2, x3, params)
    emb = get_embedding(x1, params)
    jax.block_until_ready((out1, out2, out3, emb))

    # Sanity check vs. plain-JAX reference of the same embedding net.
    def ref_emb(x):
        w1, b1, w2, b2 = params
        return jnp.maximum(x @ w1 + b1, 0.0) @ w2 + b2

    assert out1.shape == (B, E) and out2.shape == (B, E) and out3.shape == (B, E)
    assert jnp.allclose(out1, ref_emb(x1), atol=1e-5)
    assert jnp.allclose(out2, ref_emb(x2), atol=1e-5)
    assert jnp.allclose(out3, ref_emb(x3), atol=1e-5)
    assert jnp.allclose(emb, ref_emb(x1), atol=1e-5)

    # bf16 MXU-operand path smoke test (f32 bias/ReLU/accumulate stays in-kernel).
    b1_, b2_, b3_ = triplet_net_forward(x1, x2, x3, params,
                                        compute_dtype=jnp.bfloat16)
    jax.block_until_ready((b1_, b2_, b3_))
    assert b1_.shape == (B, E)
    assert jnp.allclose(b1_, ref_emb(x1), atol=5e-2)

    print("KERNEL_OK")
</pallas_src>

<mosaic_0001>
module attributes {stable_mosaic.version = 11 : i64} {
  func.func @_triplet_kernel(%arg0: i32, %arg1: memref<8x32xf32, #tpu.memory_space<vmem>>, %arg2: memref<8x32xf32, #tpu.memory_space<vmem>>, %arg3: memref<8x32xf32, #tpu.memory_space<vmem>>, %arg4: memref<32x128xf32, #tpu.memory_space<vmem>>, %arg5: memref<1x128xf32, #tpu.memory_space<vmem>>, %arg6: memref<128x128xf32, #tpu.memory_space<vmem>>, %arg7: memref<1x128xf32, #tpu.memory_space<vmem>>, %arg8: memref<8x128xf32, #tpu.memory_space<vmem>>, %arg9: memref<8x128xf32, #tpu.memory_space<vmem>>, %arg10: memref<8x128xf32, #tpu.memory_space<vmem>>) attributes {dimension_semantics = [#tpu.dimension_semantics<parallel>], iteration_bounds = array<i64: 1>, scalar_prefetch = 0 : i64, scratch_operands = 0 : i64, tpu.core_type = #tpu.core_type<tc>, window_params = [{transform_indices = @transform_0, window_bounds = array<i64: 8, 32>}, {transform_indices = @transform_1, window_bounds = array<i64: 8, 32>}, {transform_indices = @transform_2, window_bounds = array<i64: 8, 32>}, {pipeline_mode = #tpu.pipeline_mode<synchronous>, transform_indices = @transform_3, window_bounds = array<i64: 32, 128>}, {pipeline_mode = #tpu.pipeline_mode<synchronous>, transform_indices = @transform_4, window_bounds = array<i64: 1, 128>}, {pipeline_mode = #tpu.pipeline_mode<synchronous>, transform_indices = @transform_5, window_bounds = array<i64: 128, 128>}, {pipeline_mode = #tpu.pipeline_mode<synchronous>, transform_indices = @transform_6, window_bounds = array<i64: 1, 128>}, {transform_indices = @transform_7, window_bounds = array<i64: 8, 128>}, {transform_indices = @transform_8, window_bounds = array<i64: 8, 128>}, {transform_indices = @transform_9, window_bounds = array<i64: 8, 128>}]} {
    %c0 = arith.constant 0 : index
    %c0_0 = arith.constant 0 : index
    %0 = vector.load %arg4[%c0, %c0_0] : memref<32x128xf32, #tpu.memory_space<vmem>>, vector<32x128xf32>
    %c0_1 = arith.constant 0 : index
    %c0_2 = arith.constant 0 : index
    %1 = vector.load %arg5[%c0_1, %c0_2] : memref<1x128xf32, #tpu.memory_space<vmem>>, vector<1x128xf32>
    %c0_3 = arith.constant 0 : index
    %c0_4 = arith.constant 0 : index
    %2 = vector.load %arg6[%c0_3, %c0_4] : memref<128x128xf32, #tpu.memory_space<vmem>>, vector<128x128xf32>
    %c0_5 = arith.constant 0 : index
    %c0_6 = arith.constant 0 : index
    %3 = vector.load %arg7[%c0_5, %c0_6] : memref<1x128xf32, #tpu.memory_space<vmem>>, vector<1x128xf32>
    %c0_7 = arith.constant 0 : index
    %c0_8 = arith.constant 0 : index
    %4 = vector.load %arg1[%c0_7, %c0_8] : memref<8x32xf32, #tpu.memory_space<vmem>>, vector<8x32xf32>
    %cst = arith.constant dense<0.000000e+00> : vector<8x128xf32>
    %5 = tpu.matmul %4, %0, %cst {dimension_numbers = #tpu.dot_dimension_numbers<[1], [0], [0], [1], [0, 0, 1, 1], [], []>} : vector<8x32xf32>, vector<32x128xf32>, vector<8x128xf32> -> vector<8x128xf32>
    %6 = vector.broadcast %1 : vector<1x128xf32> to vector<8x128xf32>
    %7 = arith.addf %5, %6 : vector<8x128xf32>
    %cst_9 = arith.constant 0.000000e+00 : f32
    %8 = vector.broadcast %cst_9 : f32 to vector<8x128xf32>
    %9 = arith.maximumf %7, %8 : vector<8x128xf32>
    %cst_10 = arith.constant dense<0.000000e+00> : vector<8x128xf32>
    %10 = tpu.matmul %9, %2, %cst_10 {dimension_numbers = #tpu.dot_dimension_numbers<[1], [0], [0], [1], [0, 0, 1, 1], [], []>} : vector<8x128xf32>, vector<128x128xf32>, vector<8x128xf32> -> vector<8x128xf32>
    %11 = vector.broadcast %3 : vector<1x128xf32> to vector<8x128xf32>
    %12 = arith.addf %10, %11 : vector<8x128xf32>
    %c0_11 = arith.constant 0 : index
    %c0_12 = arith.constant 0 : index
    %13 = vector.load %arg8[%c0_11, %c0_12] : memref<8x128xf32, #tpu.memory_space<vmem>>, vector<8x128xf32>
    tpu.vector_store %arg8[%c0_11, %c0_12], %12 {strides = array<i32>} : memref<8x128xf32, #tpu.memory_space<vmem>>, vector<8x128xf32>,
    %c0_13 = arith.constant 0 : index
    %c0_14 = arith.constant 0 : index
    %14 = vector.load %arg2[%c0_13, %c0_14] : memref<8x32xf32, #tpu.memory_space<vmem>>, vector<8x32xf32>
    %cst_15 = arith.constant dense<0.000000e+00> : vector<8x128xf32>
    %15 = tpu.matmul %14, %0, %cst_15 {dimension_numbers = #tpu.dot_dimension_numbers<[1], [0], [0], [1], [0, 0, 1, 1], [], []>} : vector<8x32xf32>, vector<32x128xf32>, vector<8x128xf32> -> vector<8x128xf32>
    %16 = vector.broadcast %1 : vector<1x128xf32> to vector<8x128xf32>
    %17 = arith.addf %15, %16 : vector<8x128xf32>
    %cst_16 = arith.constant 0.000000e+00 : f32
    %18 = vector.broadcast %cst_16 : f32 to vector<8x128xf32>
    %19 = arith.maximumf %17, %18 : vector<8x128xf32>
    %cst_17 = arith.constant dense<0.000000e+00> : vector<8x128xf32>
    %20 = tpu.matmul %19, %2, %cst_17 {dimension_numbers = #tpu.dot_dimension_numbers<[1], [0], [0], [1], [0, 0, 1, 1], [], []>} : vector<8x128xf32>, vector<128x128xf32>, vector<8x128xf32> -> vector<8x128xf32>
    %21 = vector.broadcast %3 : vector<1x128xf32> to vector<8x128xf32>
    %22 = arith.addf %20, %21 : vector<8x128xf32>
    %c0_18 = arith.constant 0 : index
    %c0_19 = arith.constant 0 : index
    %23 = vector.load %arg9[%c0_18, %c0_19] : memref<8x128xf32, #tpu.memory_space<vmem>>, vector<8x128xf32>
    tpu.vector_store %arg9[%c0_18, %c0_19], %22 {strides = array<i32>} : memref<8x128xf32, #tpu.memory_space<vmem>>, vector<8x128xf32>,
    %c0_20 = arith.constant 0 : index
    %c0_21 = arith.constant 0 : index
    %24 = vector.load %arg3[%c0_20, %c0_21] : memref<8x32xf32, #tpu.memory_space<vmem>>, vector<8x32xf32>
    %cst_22 = arith.constant dense<0.000000e+00> : vector<8x128xf32>
    %25 = tpu.matmul %24, %0, %cst_22 {dimension_numbers = #tpu.dot_dimension_numbers<[1], [0], [0], [1], [0, 0, 1, 1], [], []>} : vector<8x32xf32>, vector<32x128xf32>, vector<8x128xf32> -> vector<8x128xf32>
    %26 = vector.broadcast %1 : vector<1x128xf32> to vector<8x128xf32>
    %27 = arith.addf %25, %26 : vector<8x128xf32>
    %cst_23 = arith.constant 0.000000e+00 : f32
    %28 = vector.broadcast %cst_23 : f32 to vector<8x128xf32>
    %29 = arith.maximumf %27, %28 : vector<8x128xf32>
    %cst_24 = arith.constant dense<0.000000e+00> : vector<8x128xf32>
    %30 = tpu.matmul %29, %2, %cst_24 {dimension_numbers = #tpu.dot_dimension_numbers<[1], [0], [0], [1], [0, 0, 1, 1], [], []>} : vector<8x128xf32>, vector<128x128xf32>, vector<8x128xf32> -> vector<8x128xf32>
    %31 = vector.broadcast %3 : vector<1x128xf32> to vector<8x128xf32>
    %32 = arith.addf %30, %31 : vector<8x128xf32>
    %c0_25 = arith.constant 0 : index
    %c0_26 = arith.constant 0 : index
    %33 = vector.load %arg10[%c0_25, %c0_26] : memref<8x128xf32, #tpu.memory_space<vmem>>, vector<8x128xf32>
    tpu.vector_store %arg10[%c0_25, %c0_26], %32 {strides = array<i32>} : memref<8x128xf32, #tpu.memory_space<vmem>>, vector<8x128xf32>,
    return
  }
  func.func @transform_0(%arg0: i32) -> (i32, i32) {
    %c0_i32 = arith.constant 0 : i32
    %c0_i32_0 = arith.constant 0 : i32
    return %arg0, %c0_i32 : i32, i32
  }
  func.func @transform_1(%arg0: i32) -> (i32, i32) {
    %c0_i32 = arith.constant 0 : i32
    %c0_i32_0 = arith.constant 0 : i32
    return %arg0, %c0_i32 : i32, i32
  }
  func.func @transform_2(%arg0: i32) -> (i32, i32) {
    %c0_i32 = arith.constant 0 : i32
    %c0_i32_0 = arith.constant 0 : i32
    return %arg0, %c0_i32 : i32, i32
  }
  func.func @transform_3(%arg0: i32) -> (i32, i32) {
    %c0_i32 = arith.constant 0 : i32
    %c0_i32_0 = arith.constant 0 : i32
    %c0_i32_1 = arith.constant 0 : i32
    return %c0_i32, %c0_i32_0 : i32, i32
  }
  func.func @transform_4(%arg0: i32) -> (i32, i32) {
    %c0_i32 = arith.constant 0 : i32
    %c0_i32_0 = arith.constant 0 : i32
    %c0_i32_1 = arith.constant 0 : i32
    return %c0_i32, %c0_i32_0 : i32, i32
  }
  func.func @transform_5(%arg0: i32) -> (i32, i32) {
    %c0_i32 = arith.constant 0 : i32
    %c0_i32_0 = arith.constant 0 : i32
    %c0_i32_1 = arith.constant 0 : i32
    return %c0_i32, %c0_i32_0 : i32, i32
  }
  func.func @transform_6(%arg0: i32) -> (i32, i32) {
    %c0_i32 = arith.constant 0 : i32
    %c0_i32_0 = arith.constant 0 : i32
    %c0_i32_1 = arith.constant 0 : i32
    return %c0_i32, %c0_i32_0 : i32, i32
  }
  func.func @transform_7(%arg0: i32) -> (i32, i32) {
    %c0_i32 = arith.constant 0 : i32
    %c0_i32_0 = arith.constant 0 : i32
    return %arg0, %c0_i32 : i32, i32
  }
  func.func @transform_8(%arg0: i32) -> (i32, i32) {
    %c0_i32 = arith.constant 0 : i32
    %c0_i32_0 = arith.constant 0 : i32
    return %arg0, %c0_i32 : i32, i32
  }
  func.func @transform_9(%arg0: i32) -> (i32, i32) {
    %c0_i32 = arith.constant 0 : i32
    %c0_i32_0 = arith.constant 0 : i32
    return %arg0, %c0_i32 : i32, i32
  }
}

</mosaic_0001>

<llo_original>
// kernel: tpu_custom_call.1
$region0: #{tpu_custom_call.1}
  #allocation0 [shape = 'u32[]', space=smem, size = 0x4, offset = 0x4, fixed_abs, tag = 'smem constant byte address 0x4 - core index']
  #allocation1 [shape = 'u32[144,128]{1,0:T(1,128)}', space=vmem, size = 0x12000, scoped, tag = 'internal scratch']
  %s0 = inlined_call_operand.hbm [shape: f32[8,32], index: 0, kind: input, shape index: {}]
  %s1 = inlined_call_operand.hbm [shape: f32[8,32], index: 1, kind: input, shape index: {}]
  %s2 = inlined_call_operand.hbm [shape: f32[8,32], index: 2, kind: input, shape index: {}]
  %s3 = inlined_call_operand.hbm [shape: f32[32,128], index: 3, kind: input, shape index: {}]
  %s4 = inlined_call_operand.vmem [shape: f32[1,128], index: 4, kind: input, shape index: {}]
  %s5 = inlined_call_operand.hbm [shape: f32[128,128], index: 5, kind: input, shape index: {}]
  %s6 = inlined_call_operand.vmem [shape: f32[1,128], index: 6, kind: input, shape index: {}]
  %s7 = inlined_call_operand.hbm [shape: f32[8,128], index: 7, kind: output, shape index: {0}]
  %s8 = inlined_call_operand.hbm [shape: f32[8,128], index: 8, kind: output, shape index: {1}]
  %s9 = inlined_call_operand.hbm [shape: f32[8,128], index: 9, kind: output, shape index: {2}]
  %10 = xla_tuple %s7, %s8, %s9
  %s11 = sld [smem:[#allocation0]]
  $region74: #{tpu_custom_call.1} parent=0
    _
  %s13 = ssub.s32 1, %s11
  %s14 = scalar_select 0, %s13, %s11
  $region1: #{tpu_custom_call.1} parent=0
    #allocation2 [shape = 'u8[4096]{0}', space=vmem, size = 0x1000, scoped, tag = 'input window, operand 0, single buffered']
    #allocation3 [shape = 's32[1]{0}', space=sflag, size = 0x4, scoped, tag = 'scoped memory for tpu_custom_call.1']
    #allocation4 [shape = 's32[1]{0}', space=sflag, size = 0x4, scoped, tag = 'scoped memory for tpu_custom_call.1']
    #allocation5 [shape = 'u8[4096]{0}', space=vmem, size = 0x1000, scoped, tag = 'input window, operand 1, single buffered']
    #allocation6 [shape = 's32[1]{0}', space=sflag, size = 0x4, scoped, tag = 'scoped memory for tpu_custom_call.1']
    #allocation7 [shape = 'u8[4096]{0}', space=vmem, size = 0x1000, scoped, tag = 'input window, operand 2, single buffered']
    #allocation8 [shape = 'u8[16384]{0}', space=vmem, size = 0x4000, scoped, tag = 'input window, operand 3, single buffered']
    #allocation9 [shape = 's32[1]{0}', space=sflag, size = 0x4, scoped, tag = 'scoped memory for tpu_custom_call.1']
    #allocation10 [shape = 'u8[65536]{0}', space=vmem, size = 0x10000, scoped, tag = 'input window, operand 5, single buffered']
    #allocation11 [shape = 'u8[4096]{0}', space=vmem, size = 0x1000, scoped, tag = 'output window, operand 0, single buffered']
    #allocation12 [shape = 'u8[4096]{0}', space=vmem, size = 0x1000, scoped, tag = 'output window, operand 1, single buffered']
    #allocation13 [shape = 's32[1]{0}', space=sflag, size = 0x4, scoped, tag = 'scoped memory for tpu_custom_call.1']
    #allocation14 [shape = 'u8[4096]{0}', space=vmem, size = 0x1000, scoped, tag = 'output window, operand 2, single buffered']
    %15 = vsyncpa [#allocation3], 0
    %16 = vsyncpa [#allocation6], 0
    %17 = vsyncpa [#allocation9], 0
    %18 = vsyncpa [#allocation4], 0
    %19 = vsyncpa [#allocation13], 0
    // Predicated region
    $region2: #{tpu_custom_call.1} parent=1 // pred_check
      _
    $region3: #{tpu_custom_call.1} parent=1 // pred_check_branch
      %21 = sbr.rel (0) target = $region5
    $region4: #{tpu_custom_call.1} parent=1 // pred_region
      %s23 = ssub.s32 128, 128
      %24 = vsyncadd [#allocation3], %s23
      %s26 = sshll.u32 [#allocation2], 4
      %s27 = int_to_ptr.vmem [resolvable:$true] %s26
      %29 = dma.hbm_to_vmem [thread:$0]  %s0, 128, %s27, [#allocation3]
    $region5: #{tpu_custom_call.1} parent=1 // pred_fallthru
      _
    // Predicated region
    $region6: #{tpu_custom_call.1} parent=1 // pred_check
      _
    $region7: #{tpu_custom_call.1} parent=1 // pred_check_branch
      %31 = sbr.rel (0) target = $region9
    $region8: #{tpu_custom_call.1} parent=1 // pred_region
      %s33 = ssub.s32 128, 128
      %34 = vsyncadd [#allocation6], %s33
      %s36 = sshll.u32 [#allocation5], 4
      %s37 = int_to_ptr.vmem [resolvable:$true] %s36
      %39 = dma.hbm_to_vmem [thread:$0]  %s1, 128, %s37, [#allocation6]
    $region9: #{tpu_custom_call.1} parent=1 // pred_fallthru
      _
    // Predicated region
    $region10: #{tpu_custom_call.1} parent=1 // pred_check
      _
    $region11: #{tpu_custom_call.1} parent=1 // pred_check_branch
      %41 = sbr.rel (0) target = $region13
    $region12: #{tpu_custom_call.1} parent=1 // pred_region
      %s43 = ssub.s32 128, 128
      %44 = vsyncadd [#allocation6], %s43
      %s46 = sshll.u32 [#allocation7], 4
      %s47 = int_to_ptr.vmem [resolvable:$true] %s46
      %49 = dma.hbm_to_vmem [thread:$0]  %s2, 128, %s47, [#allocation6]
    $region13: #{tpu_custom_call.1} parent=1 // pred_fallthru
      _
    // Predicated region
    $region14: #{tpu_custom_call.1} parent=1 // pred_check
      _
    $region15: #{tpu_custom_call.1} parent=1 // pred_check_branch
      %51 = sbr.rel (0) target = $region17
    $region16: #{tpu_custom_call.1} parent=1 // pred_region
      %s53 = ssub.s32 512, 512
      %54 = vsyncadd [#allocation9], %s53
      %s55 = sshll.u32 [#allocation8], 4
      %s56 = int_to_ptr.vmem [resolvable:$true] %s55
      %61 = dma.hbm_to_vmem [thread:$0]  %s3, 512, %s56, [#allocation9], 128, 128, 8
    $region17: #{tpu_custom_call.1} parent=1 // pred_fallthru
      _
    // Predicated region
    $region18: #{tpu_custom_call.1} parent=1 // pred_check
      _
    $region19: #{tpu_custom_call.1} parent=1 // pred_check_branch
      %63 = sbr.rel (0) target = $region21
    $region20: #{tpu_custom_call.1} parent=1 // pred_region
      _
    $region21: #{tpu_custom_call.1} parent=1 // pred_fallthru
      _
    // Predicated region
    $region22: #{tpu_custom_call.1} parent=1 // pred_check
      _
    $region23: #{tpu_custom_call.1} parent=1 // pred_check_branch
      %65 = sbr.rel (0) target = $region25
    $region24: #{tpu_custom_call.1} parent=1 // pred_region
      %s67 = ssub.s32 2048, 2048
      %68 = vsyncadd [#allocation9], %s67
      %s69 = sshll.u32 [#allocation10], 4
      %s70 = int_to_ptr.vmem [resolvable:$true] %s69
      %75 = dma.hbm_to_vmem [thread:$0]  %s5, 2048, %s70, [#allocation9], 128, 128, 8
    $region25: #{tpu_custom_call.1} parent=1 // pred_fallthru
      _
    // Predicated region
    $region26: #{tpu_custom_call.1} parent=1 // pred_check
      _
    $region27: #{tpu_custom_call.1} parent=1 // pred_check_branch
      %77 = sbr.rel (0) target = $region29
    $region28: #{tpu_custom_call.1} parent=1 // pred_region
      _
    $region29: #{tpu_custom_call.1} parent=1 // pred_fallthru
      _
    // Predicated region
    $region30: #{tpu_custom_call.1} parent=1 // pred_check
      _
    $region31: #{tpu_custom_call.1} parent=1 // pred_check_branch
      %79 = sbr.rel (0) target = $region33
    $region32: #{tpu_custom_call.1} parent=1 // pred_region
      %80 = dma.done [#allocation3], 128
    $region33: #{tpu_custom_call.1} parent=1 // pred_fallthru
      _
    // Predicated region
    $region34: #{tpu_custom_call.1} parent=1 // pred_check
      _
    $region35: #{tpu_custom_call.1} parent=1 // pred_check_branch
      %82 = sbr.rel (0) target = $region37
    $region36: #{tpu_custom_call.1} parent=1 // pred_region
      %83 = dma.done [#allocation6], 128
    $region37: #{tpu_custom_call.1} parent=1 // pred_fallthru
      _
    // Predicated region
    $region38: #{tpu_custom_call.1} parent=1 // pred_check
      _
    $region39: #{tpu_custom_call.1} parent=1 // pred_check_branch
      %85 = sbr.rel (0) target = $region41
    $region40: #{tpu_custom_call.1} parent=1 // pred_region
      %86 = dma.done [#allocation6], 128
    $region41: #{tpu_custom_call.1} parent=1 // pred_fallthru
      _
    // Predicated region
    $region42: #{tpu_custom_call.1} parent=1 // pred_check
      _
    $region43: #{tpu_custom_call.1} parent=1 // pred_check_branch
      %88 = sbr.rel (0) target = $region45
    $region44: #{tpu_custom_call.1} parent=1 // pred_region
      %89 = dma.done [#allocation9], 512
    $region45: #{tpu_custom_call.1} parent=1 // pred_fallthru
      _
    // Predicated region
    $region46: #{tpu_custom_call.1} parent=1 // pred_check
      _
    $region47: #{tpu_custom_call.1} parent=1 // pred_check_branch
      %91 = sbr.rel (0) target = $region49
    $region48: #{tpu_custom_call.1} parent=1 // pred_region
      %92 = dma.done [#allocation9], 2048
    $region49: #{tpu_custom_call.1} parent=1 // pred_fallthru
      _
    %v93 = vld [vmem:[#allocation8] sm:$0xff]
    %v94 = vld [vmem:[#allocation8 + $0x8] sm:$0xff]
    %v95 = vld [vmem:[#allocation8 + $0x10] sm:$0xff]
    %v96 = vld [vmem:[#allocation8 + $0x18] sm:$0xff]
    %v97 = vld [vmem:[%s4] sm:$0x1]
    %v98 = vld [vmem:[#allocation10] sm:$0xff]
    %v99 = vld [vmem:[#allocation10 + $0x8] sm:$0xff]
    %v100 = vld [vmem:[#allocation10 + $0x10] sm:$0xff]
    %v101 = vld [vmem:[#allocation10 + $0x18] sm:$0xff]
    %v102 = vld [vmem:[#allocation10 + $0x20] sm:$0xff]
    %v103 = vld [vmem:[#allocation10 + $0x28] sm:$0xff]
    %v104 = vld [vmem:[#allocation10 + $0x30] sm:$0xff]
    %v105 = vld [vmem:[#allocation10 + $0x38] sm:$0xff]
    %v106 = vld [vmem:[#allocation10 + $0x40] sm:$0xff]
    %v107 = vld [vmem:[#allocation10 + $0x48] sm:$0xff]
    %v108 = vld [vmem:[#allocation10 + $0x50] sm:$0xff]
    %v109 = vld [vmem:[#allocation10 + $0x58] sm:$0xff]
    %v110 = vld [vmem:[#allocation10 + $0x60] sm:$0xff]
    %v111 = vld [vmem:[#allocation10 + $0x68] sm:$0xff]
    %v112 = vld [vmem:[#allocation10 + $0x70] sm:$0xff]
    %v113 = vld [vmem:[#allocation10 + $0x78] sm:$0xff]
    %v114 = vld [vmem:[%s6] sm:$0x1]
    %v115 = vld [vmem:[#allocation2] sm:$0xff]
    %v117 = vlaneseq
    %v118 = vshrl.u32 %v117, 7
    %v119 = vsub.s32 0, %v118
    %v120 = vrot.slane %v97, %v119
    %vm122 = vcmask 261120
    %v124 = vsel %vm122, %v115, 0
    %126 = vmatprep.subr.mxu0 0.0
    %127 = vmatpush1.msra.mxu0 0.0
    %128 = vmatprep.subr.mxu0 0.0
    %129 = vmatpush1.msra.mxu0 0.0
    %130 = vmatprep.subr.mxu0 0.0
    %131 = vmatpush1.msra.mxu0 0.0
    %132 = vmatprep.subr.mxu0 0.0
    %133 = vmatpush1.msra.mxu0 0.0
    %134 = vmatprep.subr.mxu0 0.0
    %135 = vmatpush1.msra.mxu0 0.0
    %136 = vmatprep.subr.mxu0 0.0
    %137 = vmatpush1.msra.mxu0 0.0
    %138 = vmatprep.subr.mxu0 0.0
    %139 = vmatpush1.msra.mxu0 0.0
    %140 = vmatprep.subr.mxu0 0.0
    %141 = vmatpush1.msra.mxu0 0.0
    %142 = vmatprep.subr.mxu0 0.0
    %143 = vmatpush1.msra.mxu0 0.0
    %144 = vmatprep.subr.mxu0 0.0
    %145 = vmatpush1.msra.mxu0 0.0
    %146 = vmatprep.subr.mxu0 0.0
    %147 = vmatpush1.msra.mxu0 0.0
    %148 = vmatprep.subr.mxu0 0.0
    %149 = vmatpush1.msra.mxu0 0.0
    %150 = vmatprep.subr.mxu0 0.0
    %151 = vmatpush1.msra.mxu0 %v96
    %152 = vmatprep.subr.mxu0 0.0
    %153 = vmatpush1.msra.mxu0 %v95
    %154 = vmatprep.subr.mxu0 0.0
    %155 = vmatpush1.msra.mxu0 %v94
    %156 = vmatprep.subr.mxu0 0.0
    %157 = vmatpush1.msra.mxu0 %v93
    %158 = vmatprep.subr.mxu0 0.0
    %159 = vmatpush2.msra.mxu0 0.0
    %160 = vmatprep.subr.mxu0 0.0
    %161 = vmatpush2.msra.mxu0 0.0
    %162 = vmatprep.subr.mxu0 0.0
    %163 = vmatpush2.msra.mxu0 0.0
    %164 = vmatprep.subr.mxu0 0.0
    %165 = vmatpush2.msra.mxu0 0.0
    %166 = vmatprep.subr.mxu0 0.0
    %167 = vmatpush2.msra.mxu0 0.0
    %168 = vmatprep.subr.mxu0 0.0
    %169 = vmatpush2.msra.mxu0 0.0
    %170 = vmatprep.subr.mxu0 0.0
    %171 = vmatpush2.msra.mxu0 0.0
    %172 = vmatprep.subr.mxu0 0.0
    %173 = vmatpush2.msra.mxu0 0.0
    %174 = vmatprep.subr.mxu0 0.0
    %175 = vmatpush2.msra.mxu0 0.0
    %176 = vmatprep.subr.mxu0 0.0
    %177 = vmatpush2.msra.mxu0 0.0
    %178 = vmatprep.subr.mxu0 0.0
    %179 = vmatpush2.msra.mxu0 0.0
    %180 = vmatprep.subr.mxu0 0.0
    %181 = vmatpush2.msra.mxu0 0.0
    %182 = vmatprep.subr.mxu0 0.0
    %183 = vmatpush2.msra.mxu0 0.0
    %184 = vmatprep.subr.mxu0 0.0
    %185 = vmatpush2.msra.mxu0 0.0
    %186 = vmatprep.subr.mxu0 0.0
    %187 = vmatpush2.msra.mxu0 0.0
    %188 = vmatprep.subr.mxu0 0.0
    %189 = vmatpush2.msra.mxu0 0.0
    %190 = vmatprep.mubr.f32.mxu0 0.0
    %191 = vmatmul.mubr.f32.gmra.mxu0 %v124
    %v192 = vpop.f32.mrf.mxu0
    %v193 = vadd.f32 %v120, %v192
    %v194 = vpop.f32.mrf.mxu0
    %195 = vdwg.mxu0
    %v196 = vmax.f32 %v193, 0.0
    %v198 = vlaneseq
    %v199 = vshrl.u32 %v198, 7
    %v200 = vsub.s32 0, %v199
    %v201 = vrot.slane %v114, %v200
    %203 = vmatprep.subr.mxu0 0.0
    %204 = vmatpush1.msra.mxu0 %v113
    %205 = vmatprep.subr.mxu0 0.0
    %206 = vmatpush1.msra.mxu0 %v112
    %207 = vmatprep.subr.mxu0 0.0
    %208 = vmatpush1.msra.mxu0 %v111
    %209 = vmatprep.subr.mxu0 0.0
    %210 = vmatpush1.msra.mxu0 %v110
    %211 = vmatprep.subr.mxu0 0.0
    %212 = vmatpush1.msra.mxu0 %v109
    %213 = vmatprep.subr.mxu0 0.0
    %214 = vmatpush1.msra.mxu0 %v108
    %215 = vmatprep.subr.mxu0 0.0
    %216 = vmatpush1.msra.mxu0 %v107
    %217 = vmatprep.subr.mxu0 0.0
    %218 = vmatpush1.msra.mxu0 %v106
    %219 = vmatprep.subr.mxu0 0.0
    %220 = vmatpush1.msra.mxu0 %v105
    %221 = vmatprep.subr.mxu0 0.0
    %222 = vmatpush1.msra.mxu0 %v104
    %223 = vmatprep.subr.mxu0 0.0
    %224 = vmatpush1.msra.mxu0 %v103
    %225 = vmatprep.subr.mxu0 0.0
    %226 = vmatpush1.msra.mxu0 %v102
    %227 = vmatprep.subr.mxu0 0.0
    %228 = vmatpush1.msra.mxu0 %v101
    %229 = vmatprep.subr.mxu0 0.0
    %230 = vmatpush1.msra.mxu0 %v100
    %231 = vmatprep.subr.mxu0 0.0
    %232 = vmatpush1.msra.mxu0 %v99
    %233 = vmatprep.subr.mxu0 0.0
    %234 = vmatpush1.msra.mxu0 %v98
    %235 = vmatprep.subr.mxu0 0.0
    %236 = vmatpush2.msra.mxu0 0.0
    %237 = vmatprep.subr.mxu0 0.0
    %238 = vmatpush2.msra.mxu0 0.0
    %239 = vmatprep.subr.mxu0 0.0
    %240 = vmatpush2.msra.mxu0 0.0
    %241 = vmatprep.subr.mxu0 0.0
    %242 = vmatpush2.msra.mxu0 0.0
    %243 = vmatprep.subr.mxu0 0.0
    %244 = vmatpush2.msra.mxu0 0.0
    %245 = vmatprep.subr.mxu0 0.0
    %246 = vmatpush2.msra.mxu0 0.0
    %247 = vmatprep.subr.mxu0 0.0
    %248 = vmatpush2.msra.mxu0 0.0
    %249 = vmatprep.subr.mxu0 0.0
    %250 = vmatpush2.msra.mxu0 0.0
    %251 = vmatprep.subr.mxu0 0.0
    %252 = vmatpush2.msra.mxu0 0.0
    %253 = vmatprep.subr.mxu0 0.0
    %254 = vmatpush2.msra.mxu0 0.0
    %255 = vmatprep.subr.mxu0 0.0
    %256 = vmatpush2.msra.mxu0 0.0
    %257 = vmatprep.subr.mxu0 0.0
    %258 = vmatpush2.msra.mxu0 0.0
    %259 = vmatprep.subr.mxu0 0.0
    %260 = vmatpush2.msra.mxu0 0.0
    %261 = vmatprep.subr.mxu0 0.0
    %262 = vmatpush2.msra.mxu0 0.0
    %263 = vmatprep.subr.mxu0 0.0
    %264 = vmatpush2.msra.mxu0 0.0
    %265 = vmatprep.subr.mxu0 0.0
    %266 = vmatpush2.msra.mxu0 0.0
    %267 = vmatprep.mubr.f32.mxu0 0.0
    %268 = vmatmul.mubr.f32.gmra.mxu0 %v196
    %v269 = vpop.f32.mrf.mxu0
    %v270 = vadd.f32 %v201, %v269
    %v271 = vpop.f32.mrf.mxu0
    %272 = vdwg.mxu0
    %273 = vst [vmem:[#allocation11] sm:$0xff] %v270
    %v274 = vld [vmem:[#allocation5] sm:$0xff]
    %v276 = vsel %vm122, %v274, 0
    %278 = vmatprep.subr.mxu0 0.0
    %279 = vmatpush1.msra.mxu0 0.0
    %280 = vmatprep.subr.mxu0 0.0
    %281 = vmatpush1.msra.mxu0 0.0
    %282 = vmatprep.subr.mxu0 0.0
    %283 = vmatpush1.msra.mxu0 0.0
    %284 = vmatprep.subr.mxu0 0.0
    %285 = vmatpush1.msra.mxu0 0.0
    %286 = vmatprep.subr.mxu0 0.0
    %287 = vmatpush1.msra.mxu0 0.0
    %288 = vmatprep.subr.mxu0 0.0
    %289 = vmatpush1.msra.mxu0 0.0
    %290 = vmatprep.subr.mxu0 0.0
    %291 = vmatpush1.msra.mxu0 0.0
    %292 = vmatprep.subr.mxu0 0.0
    %293 = vmatpush1.msra.mxu0 0.0
    %294 = vmatprep.subr.mxu0 0.0
    %295 = vmatpush1.msra.mxu0 0.0
    %296 = vmatprep.subr.mxu0 0.0
    %297 = vmatpush1.msra.mxu0 0.0
    %298 = vmatprep.subr.mxu0 0.0
    %299 = vmatpush1.msra.mxu0 0.0
    %300 = vmatprep.subr.mxu0 0.0
    %301 = vmatpush1.msra.mxu0 0.0
    %302 = vmatprep.subr.mxu0 0.0
    %303 = vmatpush1.msra.mxu0 %v96
    %304 = vmatprep.subr.mxu0 0.0
    %305 = vmatpush1.msra.mxu0 %v95
    %306 = vmatprep.subr.mxu0 0.0
    %307 = vmatpush1.msra.mxu0 %v94
    %308 = vmatprep.subr.mxu0 0.0
    %309 = vmatpush1.msra.mxu0 %v93
    %310 = vmatprep.subr.mxu0 0.0
    %311 = vmatpush2.msra.mxu0 0.0
    %312 = vmatprep.subr.mxu0 0.0
    %313 = vmatpush2.msra.mxu0 0.0
    %314 = vmatprep.subr.mxu0 0.0
    %315 = vmatpush2.msra.mxu0 0.0
    %316 = vmatprep.subr.mxu0 0.0
    %317 = vmatpush2.msra.mxu0 0.0
    %318 = vmatprep.subr.mxu0 0.0
    %319 = vmatpush2.msra.mxu0 0.0
    %320 = vmatprep.subr.mxu0 0.0
    %321 = vmatpush2.msra.mxu0 0.0
    %322 = vmatprep.subr.mxu0 0.0
    %323 = vmatpush2.msra.mxu0 0.0
    %324 = vmatprep.subr.mxu0 0.0
    %325 = vmatpush2.msra.mxu0 0.0
    %326 = vmatprep.subr.mxu0 0.0
    %327 = vmatpush2.msra.mxu0 0.0
    %328 = vmatprep.subr.mxu0 0.0
    %329 = vmatpush2.msra.mxu0 0.0
    %330 = vmatprep.subr.mxu0 0.0
    %331 = vmatpush2.msra.mxu0 0.0
    %332 = vmatprep.subr.mxu0 0.0
    %333 = vmatpush2.msra.mxu0 0.0
    %334 = vmatprep.subr.mxu0 0.0
    %335 = vmatpush2.msra.mxu0 0.0
    %336 = vmatprep.subr.mxu0 0.0
    %337 = vmatpush2.msra.mxu0 0.0
    %338 = vmatprep.subr.mxu0 0.0
    %339 = vmatpush2.msra.mxu0 0.0
    %340 = vmatprep.subr.mxu0 0.0
    %341 = vmatpush2.msra.mxu0 0.0
    %342 = vmatprep.mubr.f32.mxu0 0.0
    %343 = vmatmul.mubr.f32.gmra.mxu0 %v276
    %v344 = vpop.f32.mrf.mxu0
    %v345 = vadd.f32 %v120, %v344
    %v346 = vpop.f32.mrf.mxu0
    %347 = vdwg.mxu0
    %v348 = vmax.f32 %v345, 0.0
    %349 = vmatprep.subr.mxu0 0.0
    %350 = vmatpush1.msra.mxu0 %v113
    %351 = vmatprep.subr.mxu0 0.0
    %352 = vmatpush1.msra.mxu0 %v112
    %353 = vmatprep.subr.mxu0 0.0
    %354 = vmatpush1.msra.mxu0 %v111
    %355 = vmatprep.subr.mxu0 0.0
    %356 = vmatpush1.msra.mxu0 %v110
    %357 = vmatprep.subr.mxu0 0.0
    %358 = vmatpush1.msra.mxu0 %v109
    %359 = vmatprep.subr.mxu0 0.0
    %360 = vmatpush1.msra.mxu0 %v108
    %361 = vmatprep.subr.mxu0 0.0
    %362 = vmatpush1.msra.mxu0 %v107
    %363 = vmatprep.subr.mxu0 0.0
    %364 = vmatpush1.msra.mxu0 %v106
    %365 = vmatprep.subr.mxu0 0.0
    %366 = vmatpush1.msra.mxu0 %v105
    %367 = vmatprep.subr.mxu0 0.0
    %368 = vmatpush1.msra.mxu0 %v104
    %369 = vmatprep.subr.mxu0 0.0
    %370 = vmatpush1.msra.mxu0 %v103
    %371 = vmatprep.subr.mxu0 0.0
    %372 = vmatpush1.msra.mxu0 %v102
    %373 = vmatprep.subr.mxu0 0.0
    %374 = vmatpush1.msra.mxu0 %v101
    %375 = vmatprep.subr.mxu0 0.0
    %376 = vmatpush1.msra.mxu0 %v100
    %377 = vmatprep.subr.mxu0 0.0
    %378 = vmatpush1.msra.mxu0 %v99
    %379 = vmatprep.subr.mxu0 0.0
    %380 = vmatpush1.msra.mxu0 %v98
    %381 = vmatprep.subr.mxu0 0.0
    %382 = vmatpush2.msra.mxu0 0.0
    %383 = vmatprep.subr.mxu0 0.0
    %384 = vmatpush2.msra.mxu0 0.0
    %385 = vmatprep.subr.mxu0 0.0
    %386 = vmatpush2.msra.mxu0 0.0
    %387 = vmatprep.subr.mxu0 0.0
    %388 = vmatpush2.msra.mxu0 0.0
    %389 = vmatprep.subr.mxu0 0.0
    %390 = vmatpush2.msra.mxu0 0.0
    %391 = vmatprep.subr.mxu0 0.0
    %392 = vmatpush2.msra.mxu0 0.0
    %393 = vmatprep.subr.mxu0 0.0
    %394 = vmatpush2.msra.mxu0 0.0
    %395 = vmatprep.subr.mxu0 0.0
    %396 = vmatpush2.msra.mxu0 0.0
    %397 = vmatprep.subr.mxu0 0.0
    %398 = vmatpush2.msra.mxu0 0.0
    %399 = vmatprep.subr.mxu0 0.0
    %400 = vmatpush2.msra.mxu0 0.0
    %401 = vmatprep.subr.mxu0 0.0
    %402 = vmatpush2.msra.mxu0 0.0
    %403 = vmatprep.subr.mxu0 0.0
    %404 = vmatpush2.msra.mxu0 0.0
    %405 = vmatprep.subr.mxu0 0.0
    %406 = vmatpush2.msra.mxu0 0.0
    %407 = vmatprep.subr.mxu0 0.0
    %408 = vmatpush2.msra.mxu0 0.0
    %409 = vmatprep.subr.mxu0 0.0
    %410 = vmatpush2.msra.mxu0 0.0
    %411 = vmatprep.subr.mxu0 0.0
    %412 = vmatpush2.msra.mxu0 0.0
    %413 = vmatprep.mubr.f32.mxu0 0.0
    %414 = vmatmul.mubr.f32.gmra.mxu0 %v348
    %v415 = vpop.f32.mrf.mxu0
    %v416 = vadd.f32 %v201, %v415
    %v417 = vpop.f32.mrf.mxu0
    %418 = vdwg.mxu0
    %419 = vst [vmem:[#allocation12] sm:$0xff] %v416
    %v420 = vld [vmem:[#allocation7] sm:$0xff]
    %v422 = vsel %vm122, %v420, 0
    %424 = vmatprep.subr.mxu0 0.0
    %425 = vmatpush1.msra.mxu0 0.0
    %426 = vmatprep.subr.mxu0 0.0
    %427 = vmatpush1.msra.mxu0 0.0
    %428 = vmatprep.subr.mxu0 0.0
    %429 = vmatpush1.msra.mxu0 0.0
    %430 = vmatprep.subr.mxu0 0.0
    %431 = vmatpush1.msra.mxu0 0.0
    %432 = vmatprep.subr.mxu0 0.0
    %433 = vmatpush1.msra.mxu0 0.0
    %434 = vmatprep.subr.mxu0 0.0
    %435 = vmatpush1.msra.mxu0 0.0
    %436 = vmatprep.subr.mxu0 0.0
    %437 = vmatpush1.msra.mxu0 0.0
    %438 = vmatprep.subr.mxu0 0.0
    %439 = vmatpush1.msra.mxu0 0.0
    %440 = vmatprep.subr.mxu0 0.0
    %441 = vmatpush1.msra.mxu0 0.0
    %442 = vmatprep.subr.mxu0 0.0
    %443 = vmatpush1.msra.mxu0 0.0
    %444 = vmatprep.subr.mxu0 0.0
    %445 = vmatpush1.msra.mxu0 0.0
    %446 = vmatprep.subr.mxu0 0.0
    %447 = vmatpush1.msra.mxu0 0.0
    %448 = vmatprep.subr.mxu0 0.0
    %449 = vmatpush1.msra.mxu0 %v96
    %450 = vmatprep.subr.mxu0 0.0
    %451 = vmatpush1.msra.mxu0 %v95
    %452 = vmatprep.subr.mxu0 0.0
    %453 = vmatpush1.msra.mxu0 %v94
    %454 = vmatprep.subr.mxu0 0.0
    %455 = vmatpush1.msra.mxu0 %v93
    %456 = vmatprep.subr.mxu0 0.0
    %457 = vmatpush2.msra.mxu0 0.0
    %458 = vmatprep.subr.mxu0 0.0
    %459 = vmatpush2.msra.mxu0 0.0
    %460 = vmatprep.subr.mxu0 0.0
    %461 = vmatpush2.msra.mxu0 0.0
    %462 = vmatprep.subr.mxu0 0.0
    %463 = vmatpush2.msra.mxu0 0.0
    %464 = vmatprep.subr.mxu0 0.0
    %465 = vmatpush2.msra.mxu0 0.0
    %466 = vmatprep.subr.mxu0 0.0
    %467 = vmatpush2.msra.mxu0 0.0
    %468 = vmatprep.subr.mxu0 0.0
    %469 = vmatpush2.msra.mxu0 0.0
    %470 = vmatprep.subr.mxu0 0.0
    %471 = vmatpush2.msra.mxu0 0.0
    %472 = vmatprep.subr.mxu0 0.0
    %473 = vmatpush2.msra.mxu0 0.0
    %474 = vmatprep.subr.mxu0 0.0
    %475 = vmatpush2.msra.mxu0 0.0
    %476 = vmatprep.subr.mxu0 0.0
    %477 = vmatpush2.msra.mxu0 0.0
    %478 = vmatprep.subr.mxu0 0.0
    %479 = vmatpush2.msra.mxu0 0.0
    %480 = vmatprep.subr.mxu0 0.0
    %481 = vmatpush2.msra.mxu0 0.0
    %482 = vmatprep.subr.mxu0 0.0
    %483 = vmatpush2.msra.mxu0 0.0
    %484 = vmatprep.subr.mxu0 0.0
    %485 = vmatpush2.msra.mxu0 0.0
    %486 = vmatprep.subr.mxu0 0.0
    %487 = vmatpush2.msra.mxu0 0.0
    %488 = vmatprep.mubr.f32.mxu0 0.0
    %489 = vmatmul.mubr.f32.gmra.mxu0 %v422
    %v490 = vpop.f32.mrf.mxu0
    %v491 = vadd.f32 %v120, %v490
    %v492 = vpop.f32.mrf.mxu0
    %493 = vdwg.mxu0
    %v494 = vmax.f32 %v491, 0.0
    %495 = vmatprep.subr.mxu0 0.0
    %496 = vmatpush1.msra.mxu0 %v113
    %497 = vmatprep.subr.mxu0 0.0
    %498 = vmatpush1.msra.mxu0 %v112
    %499 = vmatprep.subr.mxu0 0.0
    %500 = vmatpush1.msra.mxu0 %v111
    %501 = vmatprep.subr.mxu0 0.0
    %502 = vmatpush1.msra.mxu0 %v110
    %503 = vmatprep.subr.mxu0 0.0
    %504 = vmatpush1.msra.mxu0 %v109
    %505 = vmatprep.subr.mxu0 0.0
    %506 = vmatpush1.msra.mxu0 %v108
    %507 = vmatprep.subr.mxu0 0.0
    %508 = vmatpush1.msra.mxu0 %v107
    %509 = vmatprep.subr.mxu0 0.0
    %510 = vmatpush1.msra.mxu0 %v106
    %511 = vmatprep.subr.mxu0 0.0
    %512 = vmatpush1.msra.mxu0 %v105
    %513 = vmatprep.subr.mxu0 0.0
    %514 = vmatpush1.msra.mxu0 %v104
    %515 = vmatprep.subr.mxu0 0.0
    %516 = vmatpush1.msra.mxu0 %v103
    %517 = vmatprep.subr.mxu0 0.0
    %518 = vmatpush1.msra.mxu0 %v102
    %519 = vmatprep.subr.mxu0 0.0
    %520 = vmatpush1.msra.mxu0 %v101
    %521 = vmatprep.subr.mxu0 0.0
    %522 = vmatpush1.msra.mxu0 %v100
    %523 = vmatprep.subr.mxu0 0.0
    %524 = vmatpush1.msra.mxu0 %v99
    %525 = vmatprep.subr.mxu0 0.0
    %526 = vmatpush1.msra.mxu0 %v98
    %527 = vmatprep.subr.mxu0 0.0
    %528 = vmatpush2.msra.mxu0 0.0
    %529 = vmatprep.subr.mxu0 0.0
    %530 = vmatpush2.msra.mxu0 0.0
    %531 = vmatprep.subr.mxu0 0.0
    %532 = vmatpush2.msra.mxu0 0.0
    %533 = vmatprep.subr.mxu0 0.0
    %534 = vmatpush2.msra.mxu0 0.0
    %535 = vmatprep.subr.mxu0 0.0
    %536 = vmatpush2.msra.mxu0 0.0
    %537 = vmatprep.subr.mxu0 0.0
    %538 = vmatpush2.msra.mxu0 0.0
    %539 = vmatprep.subr.mxu0 0.0
    %540 = vmatpush2.msra.mxu0 0.0
    %541 = vmatprep.subr.mxu0 0.0
    %542 = vmatpush2.msra.mxu0 0.0
    %543 = vmatprep.subr.mxu0 0.0
    %544 = vmatpush2.msra.mxu0 0.0
    %545 = vmatprep.subr.mxu0 0.0
    %546 = vmatpush2.msra.mxu0 0.0
    %547 = vmatprep.subr.mxu0 0.0
    %548 = vmatpush2.msra.mxu0 0.0
    %549 = vmatprep.subr.mxu0 0.0
    %550 = vmatpush2.msra.mxu0 0.0
    %551 = vmatprep.subr.mxu0 0.0
    %552 = vmatpush2.msra.mxu0 0.0
    %553 = vmatprep.subr.mxu0 0.0
    %554 = vmatpush2.msra.mxu0 0.0
    %555 = vmatprep.subr.mxu0 0.0
    %556 = vmatpush2.msra.mxu0 0.0
    %557 = vmatprep.subr.mxu0 0.0
    %558 = vmatpush2.msra.mxu0 0.0
    %559 = vmatprep.mubr.f32.mxu0 0.0
    %560 = vmatmul.mubr.f32.gmra.mxu0 %v494
    %v561 = vpop.f32.mrf.mxu0
    %v562 = vadd.f32 %v201, %v561
    %v563 = vpop.f32.mrf.mxu0
    %564 = vdwg.mxu0
    %565 = vst [vmem:[#allocation14] sm:$0xff] %v562
    // Predicated region
    $region50: #{tpu_custom_call.1} parent=1 // pred_check
      _
    $region51: #{tpu_custom_call.1} parent=1 // pred_check_branch
      %567 = sbr.rel (0) target = $region53
    $region52: #{tpu_custom_call.1} parent=1 // pred_region
      %s569 = ssub.s32 128, 128
      %570 = vsyncadd [#allocation4], %s569
      %s572 = sshll.u32 [#allocation11], 4
      %s573 = int_to_ptr.vmem [resolvable:$true] %s572
      %575 = dma.vmem_to_hbm [thread:$0]  %s573, 128, %s7, [#allocation4]
    $region53: #{tpu_custom_call.1} parent=1 // pred_fallthru
      _
    // Predicated region
    $region54: #{tpu_custom_call.1} parent=1 // pred_check
      _
    $region55: #{tpu_custom_call.1} parent=1 // pred_check_branch
      %577 = sbr.rel (0) target = $region57
    $region56: #{tpu_custom_call.1} parent=1 // pred_region
      %s579 = ssub.s32 128, 128
      %580 = vsyncadd [#allocation13], %s579
      %s582 = sshll.u32 [#allocation12], 4
      %s583 = int_to_ptr.vmem [resolvable:$true] %s582
      %585 = dma.vmem_to_hbm [thread:$0]  %s583, 128, %s8, [#allocation13]
    $region57: #{tpu_custom_call.1} parent=1 // pred_fallthru
      _
    // Predicated region
    $region58: #{tpu_custom_call.1} parent=1 // pred_check
      _
    $region59: #{tpu_custom_call.1} parent=1 // pred_check_branch
      %587 = sbr.rel (0) target = $region61
    $region60: #{tpu_custom_call.1} parent=1 // pred_region
      %s589 = ssub.s32 128, 128
      %590 = vsyncadd [#allocation13], %s589
      %s592 = sshll.u32 [#allocation14], 4
      %s593 = int_to_ptr.vmem [resolvable:$true] %s592
      %595 = dma.vmem_to_hbm [thread:$0]  %s593, 128, %s9, [#allocation13]
    $region61: #{tpu_custom_call.1} parent=1 // pred_fallthru
      _
    // Predicated region
    $region62: #{tpu_custom_call.1} parent=1 // pred_check
      _
    $region63: #{tpu_custom_call.1} parent=1 // pred_check_branch
      %597 = sbr.rel (0) target = $region65
    $region64: #{tpu_custom_call.1} parent=1 // pred_region
      %598 = dma.done [#allocation4], 128
    $region65: #{tpu_custom_call.1} parent=1 // pred_fallthru
      _
    // Predicated region
    $region66: #{tpu_custom_call.1} parent=1 // pred_check
      _
    $region67: #{tpu_custom_call.1} parent=1 // pred_check_branch
      %600 = sbr.rel (0) target = $region69
    $region68: #{tpu_custom_call.1} parent=1 // pred_region
      %601 = dma.done [#allocation13], 128
    $region69: #{tpu_custom_call.1} parent=1 // pred_fallthru
      _
    // Predicated region
    $region70: #{tpu_custom_call.1} parent=1 // pred_check
      _
    $region71: #{tpu_custom_call.1} parent=1 // pred_check_branch
      %603 = sbr.rel (0) target = $region73
    $region72: #{tpu_custom_call.1} parent=1 // pred_region
      %604 = dma.done [#allocation13], 128
    $region73: #{tpu_custom_call.1} parent=1 // pred_fallthru
      _
    %605 = vsyncpa [#allocation3], 1
    %606 = vsyncpa [#allocation6], 1
    %607 = vsyncpa [#allocation9], 1
    %608 = vsyncpa [#allocation4], 1
    %609 = vsyncpa [#allocation13], 1

</llo_original>
